<compile_context>
chip_gen: v5e
topology: v5e:2x2
jax: 0.10.0
libtpu: 0.0.40
codegen_flags: <defaults>
</compile_context>

<pallas_src>
import math

import jax
import jax.numpy as jnp
from jax import lax
from jax.experimental import pallas as pl
from jax.experimental.pallas import tpu as pltpu


def _mcp_kernel(s, m, eps):
    """Returns kernel(x_ref, w_ref, inv_wn_ref, lab_ref, o_ref)."""
    s = float(s)
    m = float(m)
    eps = float(eps)

    def kernel(x_ref, w_ref, inv_wn_ref, lab_ref, o_ref):
        j = pl.program_id(0)
        tc = o_ref.shape[1]  # class-tile width (static)

        x = x_ref[...]       # [B, D]  (native dtype -> MXU)
        w = w_ref[...]       # [TC, D] (native dtype -> MXU)

        # NT contraction on the MXU; D is contracted on both operands, no W^T.
        ip = lax.dot_general(
            x, w,
            dimension_numbers=(((1,), (1,)), ((), ())),
            preferred_element_type=jnp.float32,
        )  # [B, TC] f32

        # 1/||x|| in f32 on the tiny [B, 1] shape (exact; negligible cost).
        xf = x.astype(jnp.float32)
        xn = jnp.sqrt(jnp.sum(xf * xf, axis=-1, keepdims=True))      # [B, 1]
        inv_xn = 1.0 / jnp.maximum(xn, eps)                          # [B, 1]

        # s folded into the normalization scale; inv_wn is the precomputed
        # lane-major [1, TC] slice of 1/||W||.
        scale = (s * inv_xn) * inv_wn_ref[...]                       # [B, TC]
        scaled = ip * scale                                          # s * cosine

        # Margin via a single select against the GLOBAL column index.
        col = j * tc + lax.broadcasted_iota(jnp.int32, scaled.shape, 1)
        o_ref[...] = jnp.where(col == lab_ref[...], scaled - s * m, scaled)

    return kernel


def margin_cosine_product(x, weight, label, *, s=30.0, m=0.4, eps=1e-8,
                          block_c=512):
    """x: [B, D], weight: [C, D], label: [B] int -> [B, C] float32."""
    B, D = x.shape
    C, D2 = weight.shape
    assert D == D2

    lab2d = label.reshape(B, 1).astype(jnp.int32)

    # Precompute 1/||W||_2 per class row outside the kernel (lane-major [1, C]).
    wn = jnp.sqrt(jnp.sum(weight.astype(jnp.float32) ** 2, axis=1))
    inv_wn = (1.0 / jnp.maximum(wn, eps)).reshape(1, C).astype(jnp.float32)

    # Class-tile width: multiple of 128 when possible, capped by C.
    tc = min(block_c, C)
    grid = (pl.cdiv(C, tc),)

    # TODO(synk): optional per-chip tuning — bf16 weights + pl.Buffered(3) on
    # the W BlockSpec for v5e, larger tc on v6e, and a K grid axis for very
    # large D; not needed for these shapes.
    return pl.pallas_call(
        _mcp_kernel(s, m, eps),
        out_shape=jax.ShapeDtypeStruct((B, C), jnp.float32),
        grid_spec=pltpu.PrefetchScalarGridSpec(
            num_scalar_prefetch=0,
            grid=grid,
            in_specs=[
                pl.BlockSpec((B, D), lambda j: (0, 0)),    # x: resident
                pl.BlockSpec((tc, D), lambda j: (j, 0)),   # W: streamed over C
                pl.BlockSpec((1, tc), lambda j: (0, j)),   # 1/||W||: streamed
                pl.BlockSpec((B, 1), lambda j: (0, 0)),    # labels: resident
            ],
            out_specs=pl.BlockSpec((B, tc), lambda j: (0, j)),
        ),
        compiler_params=pltpu.CompilerParams(
            dimension_semantics=("parallel",),   # megacore sharding on v7x
            vmem_limit_bytes=32 * 1024 * 1024,
        ),
    )(x, weight, inv_wn, lab2d)


def xavier_uniform(key, out_features, in_features, dtype=jnp.float32):
    # Matches torch.nn.init.xavier_uniform_ bound (gain=1).
    bound = math.sqrt(6.0 / (in_features + out_features))
    return jax.random.uniform(
        key, (out_features, in_features), dtype=dtype, minval=-bound, maxval=bound
    )


if __name__ == "__main__":
    # Small shapes; out_features chosen > block_c so the C-tiling (and the
    # global-column one-hot) is actually exercised.
    B, in_features, out_features = 8, 64, 256
    s_, m_ = 30.0, 0.4

    key = jax.random.PRNGKey(0)
    kx, kw, kl = jax.random.split(key, 3)

    x = jax.random.normal(kx, (B, in_features), dtype=jnp.float32)
    weight = xavier_uniform(kw, out_features, in_features)
    label = jax.random.randint(kl, (B,), 0, out_features, dtype=jnp.int32)

    out = margin_cosine_product(x, weight, label, s=s_, m=m_, block_c=128)
    out = jax.block_until_ready(out)

    # Pure-JAX reference check.
    ip = x @ weight.T
    denom = jnp.maximum(
        jnp.linalg.norm(x, axis=1)[:, None] * jnp.linalg.norm(weight, axis=1)[None, :],
        1e-8,
    )
    cosine = ip / denom
    one_hot = jax.nn.one_hot(label, out_features, dtype=jnp.float32)
    ref = s_ * (cosine - one_hot * m_)

    assert out.shape == (B, out_features)
    assert jnp.allclose(out, ref, atol=2e-4, rtol=1e-4), (
        float(jnp.max(jnp.abs(out - ref)))
    )
    print("KERNEL_OK")
</pallas_src>

<mosaic_0001>
module attributes {stable_mosaic.version = 11 : i64} {
  func.func @kernel(%arg0: i32, %arg1: memref<8x64xf32, #tpu.memory_space<vmem>>, %arg2: memref<128x64xf32, #tpu.memory_space<vmem>>, %arg3: memref<1x128xf32, #tpu.memory_space<vmem>>, %arg4: memref<8x1xi32, #tpu.memory_space<vmem>>, %arg5: memref<8x128xf32, #tpu.memory_space<vmem>>) attributes {dimension_semantics = [#tpu.dimension_semantics<parallel>], iteration_bounds = array<i64: 2>, scalar_prefetch = 0 : i64, scratch_operands = 0 : i64, tpu.core_type = #tpu.core_type<tc>, window_params = [{pipeline_mode = #tpu.pipeline_mode<synchronous>, transform_indices = @transform_0, window_bounds = array<i64: 8, 64>}, {transform_indices = @transform_1, window_bounds = array<i64: 128, 64>}, {transform_indices = @transform_2, window_bounds = array<i64: 1, 128>}, {pipeline_mode = #tpu.pipeline_mode<synchronous>, transform_indices = @transform_3, window_bounds = array<i64: 8, 1>}, {transform_indices = @transform_4, window_bounds = array<i64: 8, 128>}]} {
    %c0 = arith.constant 0 : index
    %c0_0 = arith.constant 0 : index
    %0 = vector.load %arg1[%c0, %c0_0] : memref<8x64xf32, #tpu.memory_space<vmem>>, vector<8x64xf32>
    %c0_1 = arith.constant 0 : index
    %c0_2 = arith.constant 0 : index
    %1 = vector.load %arg2[%c0_1, %c0_2] : memref<128x64xf32, #tpu.memory_space<vmem>>, vector<128x64xf32>
    %cst = arith.constant dense<0.000000e+00> : vector<8x128xf32>
    %2 = tpu.matmul %0, %1, %cst {dimension_numbers = #tpu.dot_dimension_numbers<[1], [1], [0], [0], [0, 0, 1, 0], [], []>} : vector<8x64xf32>, vector<128x64xf32>, vector<8x128xf32> -> vector<8x128xf32>
    %3 = arith.mulf %0, %0 : vector<8x64xf32>
    %cst_3 = arith.constant dense<0.000000e+00> : vector<8xf32>
    %4 = vector.multi_reduction <add>, %3, %cst_3 [1] : vector<8x64xf32> to vector<8xf32>
    %5 = vector.shape_cast %4 : vector<8xf32> to vector<8x1xf32>
    %6 = math.sqrt %5 : vector<8x1xf32>
    %cst_4 = arith.constant 9.99999993E-9 : f32
    %7 = vector.broadcast %cst_4 : f32 to vector<8x1xf32>
    %8 = arith.maximumf %6, %7 : vector<8x1xf32>
    %cst_5 = arith.constant 1.000000e+00 : f32
    %9 = vector.broadcast %cst_5 : f32 to vector<8x1xf32>
    %10 = arith.divf %9, %8 : vector<8x1xf32>
    %cst_6 = arith.constant 3.000000e+01 : f32
    %11 = vector.broadcast %cst_6 : f32 to vector<8x1xf32>
    %12 = arith.mulf %11, %10 : vector<8x1xf32>
    %c0_7 = arith.constant 0 : index
    %c0_8 = arith.constant 0 : index
    %13 = vector.load %arg3[%c0_7, %c0_8] : memref<1x128xf32, #tpu.memory_space<vmem>>, vector<1x128xf32>
    %14 = vector.broadcast %12 : vector<8x1xf32> to vector<8x128xf32>
    %15 = vector.broadcast %13 : vector<1x128xf32> to vector<8x128xf32>
    %16 = arith.mulf %14, %15 : vector<8x128xf32>
    %17 = arith.mulf %2, %16 : vector<8x128xf32>
    %c128_i32 = arith.constant 128 : i32
    %18 = arith.muli %arg0, %c128_i32 : i32
    %19 = tpu.iota {dimensions = array<i32: 1>} : vector<8x128xi32>
    %20 = vector.broadcast %18 : i32 to vector<8x128xi32>
    %21 = arith.addi %20, %19 : vector<8x128xi32>
    %c0_9 = arith.constant 0 : index
    %c0_10 = arith.constant 0 : index
    %22 = vector.load %arg4[%c0_9, %c0_10] : memref<8x1xi32, #tpu.memory_space<vmem>>, vector<8x1xi32>
    %23 = vector.broadcast %22 : vector<8x1xi32> to vector<8x128xi32>
    %24 = arith.cmpi eq, %21, %23 : vector<8x128xi32>
    %cst_11 = arith.constant 1.200000e+01 : f32
    %25 = vector.broadcast %cst_11 : f32 to vector<8x128xf32>
    %26 = arith.subf %17, %25 : vector<8x128xf32>
    %27 = arith.select %24, %26, %17 : vector<8x128xi1>, vector<8x128xf32>
    %c0_12 = arith.constant 0 : index
    %c0_13 = arith.constant 0 : index
    %28 = vector.load %arg5[%c0_12, %c0_13] : memref<8x128xf32, #tpu.memory_space<vmem>>, vector<8x128xf32>
    tpu.vector_store %arg5[%c0_12, %c0_13], %27 {strides = array<i32>} : memref<8x128xf32, #tpu.memory_space<vmem>>, vector<8x128xf32>,
    return
  }
  func.func @transform_0(%arg0: i32) -> (i32, i32) {
    %c0_i32 = arith.constant 0 : i32
    %c0_i32_0 = arith.constant 0 : i32
    %c0_i32_1 = arith.constant 0 : i32
    return %c0_i32, %c0_i32_0 : i32, i32
  }
  func.func @transform_1(%arg0: i32) -> (i32, i32) {
    %c0_i32 = arith.constant 0 : i32
    %c0_i32_0 = arith.constant 0 : i32
    return %arg0, %c0_i32 : i32, i32
  }
  func.func @transform_2(%arg0: i32) -> (i32, i32) {
    %c0_i32 = arith.constant 0 : i32
    %c0_i32_0 = arith.constant 0 : i32
    return %c0_i32, %arg0 : i32, i32
  }
  func.func @transform_3(%arg0: i32) -> (i32, i32) {
    %c0_i32 = arith.constant 0 : i32
    %c0_i32_0 = arith.constant 0 : i32
    %c0_i32_1 = arith.constant 0 : i32
    return %c0_i32, %c0_i32_0 : i32, i32
  }
  func.func @transform_4(%arg0: i32) -> (i32, i32) {
    %c0_i32 = arith.constant 0 : i32
    %c0_i32_0 = arith.constant 0 : i32
    return %c0_i32, %arg0 : i32, i32
  }
}

</mosaic_0001>

<llo_original>
// kernel: tpu_custom_call.1
$region0: #{tpu_custom_call.1}
  #allocation0 [shape = 'u32[]', space=smem, size = 0x4, offset = 0x4, fixed_abs, tag = 'smem constant byte address 0x4 - core index']
  #allocation1 [shape = 'u32[72,128]{1,0:T(1,128)}', space=vmem, size = 0x9000, scoped, tag = 'internal scratch']
  %s0 = inlined_call_operand.vmem [shape: f32[8,64], index: 0, kind: input, shape index: {}]
  %s1 = inlined_call_operand.vmem [shape: f32[256,64], index: 1, kind: input, shape index: {}]
  %s2 = inlined_call_operand.vmem [shape: f32[1,256], index: 2, kind: input, shape index: {}]
  %s3 = inlined_call_operand.vmem [shape: s32[8,1], index: 3, kind: input, shape index: {}]
  %s4 = inlined_call_operand.hbm [shape: f32[8,256], index: 4, kind: output, shape index: {}]
  %s5 = sld [smem:[#allocation0]]
  $region49: #{tpu_custom_call.1} parent=0
    _
  %s7 = ssub.s32 1, %s5
  %s8 = scalar_select 0, %s7, %s5
  $region1: #{tpu_custom_call.1} parent=0
    #allocation2 [shape = 'u8[8192]{0}', space=vmem, size = 0x2000, scoped, tag = 'output window, operand 0']
    #allocation3 [shape = 's32[2]{0}', space=sflag, size = 0x8, scoped, tag = 'scoped memory for tpu_custom_call.1']
    %9 = vsyncpa [#allocation3], 0
    %s10 = scalar_lea.sflag [#allocation3], 1
    %11 = vsyncpa %s10, 0
    loop: start=0, step=1, limit=4
    $region2: #{tpu_custom_call.1} parent=1 // loop_pre_header
      _
    $region3: #{tpu_custom_call.1} parent=1 // loop_header
      %s13 = sphi 0, %s17
      %p14 = scmp.ge.s32.totalorder %s13, 4
      %s21 = sphi 0, %s21
      %s23 = sphi 0, %s21
      %s24 = sphi 0, %s23
      %s38 = sphi 0, %s24
      %s44 = sphi 0, %s46
      %s47 = sphi 0, %s44
      %s48 = sphi 0, %s47
      %s64 = sphi 0, %s48
      %s70 = sphi 0, %s72
      %s73 = sphi 0, %s70
      %s74 = sphi 0, %s73
      %s90 = sphi 0, %s74
      %s94 = sphi 0, %s94
      %s96 = sphi 0, %s94
      %s97 = sphi 0, %s96
      %s111 = sphi 0, %s97
      %s117 = sphi 0, %s119
      %s120 = sphi 0, %s117
      %s121 = sphi 0, %s120
      %s137 = sphi 0, %s121
    $region4: #{tpu_custom_call.1} parent=1 // loop_header_branch
      %16 = sbr.rel (%p14) target = $region8
    $region5: #{tpu_custom_call.1} parent=1 // loop_body
      %s18 = ssub.s32 %s13, 1
      %s19 = ssub.s32 %s13, 2
      %s20 = sadd.s32 %s13, 1
      %s22 = sadd.s32 %s21, 1
      %p25 = scmp.eq.s32.totalorder %s13, 1
      %p26 = scmp.ne.s32.totalorder %s21, %s23
      %p27 = scmp.eq.s32.totalorder %s13, 0
      %p28 = por %p26, %p27
      %p29 = scmp.ne.s32.totalorder %s21, %s23
      %p30 = scmp.eq.s32.totalorder %s18, 1
      %p31 = por %p29, %p30
      %p32 = scmp.ne.s32.totalorder %s23, %s24
      %p33 = scmp.eq.s32.totalorder %s18, 0
      %p34 = por %p32, %p33
      %p35 = scmp.ne.s32.totalorder %s23, %s24
      %p36 = scmp.eq.s32.totalorder %s19, 1
      %p37 = por %p35, %p36
      %p39 = scmp.ne.s32.totalorder %s24, %s38
      %p40 = scmp.eq.s32.totalorder %s19, 0
      %p41 = por %p39, %p40
      %s42 = ssub.s32 %s13, %s20
      %p43 = scmp.eq.s32.totalorder %s42, 0
      %s45 = sadd.s32 %s44, 1
      %s46 = scalar_select %p43, %s44, %s45
      %p49 = pneg %p43
      %p50 = scmp.eq.s32.totalorder %s13, 1
      %p51 = por %p49, %p50
      %p52 = scmp.ne.s32.totalorder %s44, %s47
      %p53 = scmp.eq.s32.totalorder %s13, 0
      %p54 = por %p52, %p53
      %p55 = scmp.ne.s32.totalorder %s44, %s47
      %p56 = scmp.eq.s32.totalorder %s18, 1
      %p57 = por %p55, %p56
      %p58 = scmp.ne.s32.totalorder %s47, %s48
      %p59 = scmp.eq.s32.totalorder %s18, 0
      %p60 = por %p58, %p59
      %p61 = scmp.ne.s32.totalorder %s47, %s48
      %p62 = scmp.eq.s32.totalorder %s19, 1
      %p63 = por %p61, %p62
      %p65 = scmp.ne.s32.totalorder %s48, %s64
      %p66 = scmp.eq.s32.totalorder %s19, 0
      %p67 = por %p65, %p66
      %s68 = ssub.s32 %s13, %s20
      %p69 = scmp.eq.s32.totalorder %s68, 0
      %s71 = sadd.s32 %s70, 1
      %s72 = scalar_select %p69, %s70, %s71
      %p75 = pneg %p69
      %p76 = scmp.eq.s32.totalorder %s13, 1
      %p77 = por %p75, %p76
      %p78 = scmp.ne.s32.totalorder %s70, %s73
      %p79 = scmp.eq.s32.totalorder %s13, 0
      %p80 = por %p78, %p79
      %p81 = scmp.ne.s32.totalorder %s70, %s73
      %p82 = scmp.eq.s32.totalorder %s18, 1
      %p83 = por %p81, %p82
      %p84 = scmp.ne.s32.totalorder %s73, %s74
      %p85 = scmp.eq.s32.totalorder %s18, 0
      %p86 = por %p84, %p85
      %p87 = scmp.ne.s32.totalorder %s73, %s74
      %p88 = scmp.eq.s32.totalorder %s19, 1
      %p89 = por %p87, %p88
      %p91 = scmp.ne.s32.totalorder %s74, %s90
      %p92 = scmp.eq.s32.totalorder %s19, 0
      %p93 = por %p91, %p92
      %s95 = sadd.s32 %s94, 1
      %p98 = scmp.eq.s32.totalorder %s13, 1
      %p99 = scmp.ne.s32.totalorder %s94, %s96
      %p100 = scmp.eq.s32.totalorder %s13, 0
      %p101 = por %p99, %p100
      %p102 = scmp.ne.s32.totalorder %s94, %s96
      %p103 = scmp.eq.s32.totalorder %s18, 1
      %p104 = por %p102, %p103
      %p105 = scmp.ne.s32.totalorder %s96, %s97
      %p106 = scmp.eq.s32.totalorder %s18, 0
      %p107 = por %p105, %p106
      %p108 = scmp.ne.s32.totalorder %s96, %s97
      %p109 = scmp.eq.s32.totalorder %s19, 1
      %p110 = por %p108, %p109
      %p112 = scmp.ne.s32.totalorder %s97, %s111
      %p113 = scmp.eq.s32.totalorder %s19, 0
      %p114 = por %p112, %p113
      %s115 = ssub.s32 %s13, %s20
      %p116 = scmp.eq.s32.totalorder %s115, 0
      %s118 = sadd.s32 %s117, 1
      %s119 = scalar_select %p116, %s117, %s118
      %p122 = pneg %p116
      %p123 = scmp.eq.s32.totalorder %s13, 1
      %p124 = por %p122, %p123
      %p125 = scmp.ne.s32.totalorder %s117, %s120
      %p126 = scmp.eq.s32.totalorder %s13, 0
      %p127 = por %p125, %p126
      %p128 = scmp.ne.s32.totalorder %s117, %s120
      %p129 = scmp.eq.s32.totalorder %s18, 1
      %p130 = por %p128, %p129
      %p131 = scmp.ne.s32.totalorder %s120, %s121
      %p132 = scmp.eq.s32.totalorder %s18, 0
      %p133 = por %p131, %p132
      %p134 = scmp.ne.s32.totalorder %s120, %s121
      %p135 = scmp.eq.s32.totalorder %s19, 1
      %p136 = por %p134, %p135
      %p138 = scmp.ne.s32.totalorder %s121, %s137
      %p139 = scmp.eq.s32.totalorder %s19, 0
      %p140 = por %p138, %p139
      %p141 = scmp.le.s32.totalorder 1, %s13
      %p142 = scmp.lt.s32.totalorder %s13, 3
      %p143 = pnand %p141, %p142
      %p144 = pneg %p143
      // Predicated region
      $region9: #{tpu_custom_call.1} parent=5 // pred_check
        _
      $region10: #{tpu_custom_call.1} parent=5 // pred_check_branch
        %146 = sbr.rel (%p143) target = $region12
      $region11: #{tpu_custom_call.1} parent=5 // pred_region
        %s147 = ssub.s32 %s13, 1
        // Predicated region
        $region13: #{tpu_custom_call.1} parent=11 // pred_check
          %p148 = pneg %p34
        $region14: #{tpu_custom_call.1} parent=11 // pred_check_branch
          %150 = sbr.rel (%p148) target = $region16
        $region15: #{tpu_custom_call.1} parent=11 // pred_region
          _
        $region16: #{tpu_custom_call.1} parent=11 // pred_fallthru
          _
        // Predicated region
        $region17: #{tpu_custom_call.1} parent=11 // pred_check
          %p151 = pneg %p107
        $region18: #{tpu_custom_call.1} parent=11 // pred_check_branch
          %153 = sbr.rel (%p151) target = $region20
        $region19: #{tpu_custom_call.1} parent=11 // pred_region
          _
        $region20: #{tpu_custom_call.1} parent=11 // pred_fallthru
          _
      $region12: #{tpu_custom_call.1} parent=5 // pred_fallthru
        _
      %p154 = scmp.lt.s32.totalorder %s13, 2
      // Predicated region
      $region21: #{tpu_custom_call.1} parent=5 // pred_check
        %p155 = pneg %p154
      $region22: #{tpu_custom_call.1} parent=5 // pred_check_branch
        %157 = sbr.rel (%p155) target = $region24
      $region23: #{tpu_custom_call.1} parent=5 // pred_region
        // Predicated region
        $region25: #{tpu_custom_call.1} parent=23 // pred_check
          %p158 = pneg %p54
        $region26: #{tpu_custom_call.1} parent=23 // pred_check_branch
          %160 = sbr.rel (%p158) target = $region28
        $region27: #{tpu_custom_call.1} parent=23 // pred_region
          %s161 = smul.u32 16, %s13
          %p162 = scmp.lt.s32.totalorder %s161, 31
          %s163 = scalar_select %p162, %s161, 31
          %s164 = smul.addr %s163, 8
          %s165 = scalar_lea.vmem %s1, %s164
          %s166 = smul.u32 16, %s13
        $region28: #{tpu_custom_call.1} parent=23 // pred_fallthru
          _
        // Predicated region
        $region29: #{tpu_custom_call.1} parent=23 // pred_check
          %p167 = pneg %p80
        $region30: #{tpu_custom_call.1} parent=23 // pred_check_branch
          %169 = sbr.rel (%p167) target = $region32
        $region31: #{tpu_custom_call.1} parent=23 // pred_region
          %p170 = scmp.lt.s32.totalorder %s13, 1
          %s171 = scalar_select %p170, %s13, 1
          %s172 = scalar_lea.vmem %s2, %s171
        $region32: #{tpu_custom_call.1} parent=23 // pred_fallthru
          _
      $region24: #{tpu_custom_call.1} parent=5 // pred_fallthru
        _
      %p173 = scmp.le.s32.totalorder 1, %s13
      %p174 = scmp.lt.s32.totalorder %s13, 3
      %p175 = pnand %p173, %p174
      %p176 = pneg %p175
      // Predicated region
      $region33: #{tpu_custom_call.1} parent=5 // pred_check
        _
      $region34: #{tpu_custom_call.1} parent=5 // pred_check_branch
        %178 = sbr.rel (%p175) target = $region36
      $region35: #{tpu_custom_call.1} parent=5 // pred_region
        %s179 = ssub.s32 %s13, 1
        %p180 = pneg %p34
        %p181 = pneg %p31
        %s182 = smul.u32 16, %s18
        %p183 = scmp.lt.s32.totalorder %s182, 31
        %s184 = scalar_select %p183, %s182, 31
        %s185 = smul.addr %s184, 8
        %s186 = scalar_lea.vmem %s1, %s185
        %p187 = pneg %p60
        %p188 = pneg %p57
        %p189 = scmp.lt.s32.totalorder %s18, 1
        %s190 = scalar_select %p189, %s18, 1
        %s191 = scalar_lea.vmem %s2, %s190
        %p192 = pneg %p86
        %p193 = pneg %p83
        %p194 = pneg %p107
        %p195 = pneg %p104
        %p196 = pneg %p133
        %p197 = pneg %p130
        %s198 = sand.u32 %s120, 1
        %s199 = scalar_lea.sflag [#allocation3], %s198
        %s200 = sand.u32 %s120, 1
        %s201 = smul.addr %s200, 8
        %s202 = scalar_lea.vmem [#allocation2], %s201
        %s203 = smul.u32 16, %s18
        %p204 = scmp.lt.s32.totalorder %s203, 31
        %s205 = scalar_select %p204, %s203, 31
        %s206 = smul.addr %s205, 8
        %s207 = scalar_lea.vmem %s1, %s206
        %s208 = smul.u32 16, %s18
        %p209 = scmp.lt.s32.totalorder %s18, 1
        %s210 = scalar_select %p209, %s18, 1
        %s211 = scalar_lea.vmem %s2, %s210
        %v212 = vld [vmem:[%s0] sm:$0xff]
        %v213 = vld [vmem:[%s207] sm:$0xff]
        %v214 = vld [vmem:[%s207 + $0x8] sm:$0xff]
        %v215 = vld [vmem:[%s207 + $0x10] sm:$0xff]
        %v216 = vld [vmem:[%s207 + $0x18] sm:$0xff]
        %v217 = vld [vmem:[%s207 + $0x20] sm:$0xff]
        %v218 = vld [vmem:[%s207 + $0x28] sm:$0xff]
        %v219 = vld [vmem:[%s207 + $0x30] sm:$0xff]
        %v220 = vld [vmem:[%s207 + $0x38] sm:$0xff]
        %v221 = vld [vmem:[%s207 + $0x40] sm:$0xff]
        %v222 = vld [vmem:[%s207 + $0x48] sm:$0xff]
        %v223 = vld [vmem:[%s207 + $0x50] sm:$0xff]
        %v224 = vld [vmem:[%s207 + $0x58] sm:$0xff]
        %v225 = vld [vmem:[%s207 + $0x60] sm:$0xff]
        %v226 = vld [vmem:[%s207 + $0x68] sm:$0xff]
        %v227 = vld [vmem:[%s207 + $0x70] sm:$0xff]
        %v228 = vld [vmem:[%s207 + $0x78] sm:$0xff]
        %vm229 = vcmask 523264
        %v231 = vsel %vm229, %v212, 0
        %v234 = vsel %vm229, %v213, 0
        %v237 = vsel %vm229, %v214, 0
        %v240 = vsel %vm229, %v215, 0
        %v243 = vsel %vm229, %v216, 0
        %v246 = vsel %vm229, %v217, 0
        %v249 = vsel %vm229, %v218, 0
        %v252 = vsel %vm229, %v219, 0
        %v255 = vsel %vm229, %v220, 0
        %v258 = vsel %vm229, %v221, 0
        %v261 = vsel %vm229, %v222, 0
        %v264 = vsel %vm229, %v223, 0
        %v267 = vsel %vm229, %v224, 0
        %v270 = vsel %vm229, %v225, 0
        %v273 = vsel %vm229, %v226, 0
        %v276 = vsel %vm229, %v227, 0
        %v279 = vsel %vm229, %v228, 0
        %281 = vmatpush.xpose.msra.mxu0 %v279
        %282 = vmatpush.xpose.msra.mxu0 %v276
        %283 = vmatpush.xpose.msra.mxu0 %v273
        %284 = vmatpush.xpose.msra.mxu0 %v270
        %285 = vmatpush.xpose.msra.mxu0 %v267
        %286 = vmatpush.xpose.msra.mxu0 %v264
        %287 = vmatpush.xpose.msra.mxu0 %v261
        %288 = vmatpush.xpose.msra.mxu0 %v258
        %289 = vmatpush.xpose.msra.mxu0 %v255
        %290 = vmatpush.xpose.msra.mxu0 %v252
        %291 = vmatpush.xpose.msra.mxu0 %v249
        %292 = vmatpush.xpose.msra.mxu0 %v246
        %293 = vmatpush.xpose.msra.mxu0 %v243
        %294 = vmatpush.xpose.msra.mxu0 %v240
        %295 = vmatpush.xpose.msra.mxu0 %v237
        %296 = vmatpush.xpose.msra.mxu0 %v234
        %297 = vmatmul.f32.gmra.mxu0 %v231
        %v298 = vpop.f32.mrf.mxu0
        %v299 = vadd.f32 0.0, %v298
        %300 = vdwg.mxu0
        %v301 = vmul.f32 %v212, %v212
        %v302 = vsel %vm229, %v301, 0.0
        %303 = vadd.xlane.f32.xlu0 %v302
        %v304 = vpop.xlane.xlu0 %303
        %v305 = vrsqrt.pop %v304
        %v306 = vmul.f32 %v305, %v304
        %v307 = vmul.f32 %v306, %v305
        %v308 = vmul.f32 0.5, %v307
        %v309 = vsub.f32 1.5, %v308
        %v310 = vmul.f32 %v305, %v309
        %v311 = vmul.f32 %v304, %v310
        %vm312 = vcmp.eq.f32.partialorder %v304, inf
        %v313 = vsel %vm312, %v304, %v311
        %vm314 = vcmp.eq.f32.partialorder %v304, 0.0
        %v315 = vand.u32 %v304, 2147483648
        %v316 = vsel %vm314, %v315, %v313
        %v317 = vmax.f32 %v316, 1e-08
        %v318 = vrcp.pop %v317
        %v319 = vmul.f32 %v317, %v318
        %v320 = vsub.f32 1.0, %v319
        %v321 = vmul.f32 %v318, %v320
        %v322 = vadd.f32 %v318, %v321
        %vm323 = vweird.f32 %v317
        %vm324 = vweird.f32 %v318
        %vm325 = vmor %vm323, %vm324
        %v326 = vsel %vm325, %v318, %v322
        %v327 = vand.u32 2147483647, %v317
        %vm328 = vcmp.eq.f32.partialorder %v327, 8.507059e+37
        %v329 = vand.u32 %v317, 2147483648
        %v330 = vor.u32 1.1754944e-38, %v329
        %v331 = vsel %vm328, %v330, %v326
        %v332 = vmul.f32 1.0, %v331
        %v333 = vmul.f32 %v332, 30.0
        %v334 = vld [vmem:[%s211] sm:$0x1]
        %v336 = vperm.slane %v334, 0
        %v338 = vmul.f32 %v333, %v336
        %v339 = vmul.f32 %v299, %v338
        %s340 = smul.u32 %s18, 128
        %v341 = vlaneseq
        %v342 = vand.u32 %v341, 127
        %v343 = vstv %s340
        %v344 = vadd.s32 %v343, %v342
        %v345 = vld [vmem:[%s3] sm:$0xff]
        %346 = vset.pattern.permute.xlu0 0
        %347 = vperm.xlu0 %346, %v345
        %v348 = vpop.permute.xlu0 %347
        %vm349 = vcmp.eq.s32.totalorder %v344, %v348
        %v350 = vsub.f32 %v339, 12.0
        %v351 = vsel %vm349, %v350, %v339
        %352 = vst [vmem:[%s202] sm:$0xff] %v351
        %s353 = sand.u32 %s120, 1
        %s354 = scalar_lea.sflag [#allocation3], %s353
        %s355 = sand.u32 %s120, 1
        %s356 = smul.addr %s355, 8
        %s357 = scalar_lea.vmem [#allocation2], %s356
        // Predicated region
        $region37: #{tpu_custom_call.1} parent=35 // pred_check
          %p358 = pneg %p130
        $region38: #{tpu_custom_call.1} parent=35 // pred_check_branch
          %360 = sbr.rel (%p358) target = $region40
        $region39: #{tpu_custom_call.1} parent=35 // pred_region
          %362 = vsyncadd %s354, 0
          %s363 = smul.addr %s18, 8
          %s364 = scalar_lea.hbm %s4, %s363
          %s366 = sshll.u32 %s357, 4
          %s367 = int_to_ptr.vmem [resolvable:$true] %s366
          %s368 = sshll.u32 %s364, 4
          %s369 = int_to_ptr.hbm [resolvable:$true] %s368
          %371 = dma.vmem_to_hbm [thread:$0]  %s367, 128, %s369, %s354
        $region40: #{tpu_custom_call.1} parent=35 // pred_fallthru
          _
      $region36: #{tpu_custom_call.1} parent=5 // pred_fallthru
        _
      %p372 = scmp.le.s32.totalorder 2, %s13
      // Predicated region
      $region41: #{tpu_custom_call.1} parent=5 // pred_check
        %p373 = pneg %p372
      $region42: #{tpu_custom_call.1} parent=5 // pred_check_branch
        %375 = sbr.rel (%p373) target = $region44
      $region43: #{tpu_custom_call.1} parent=5 // pred_region
        %s376 = ssub.s32 %s13, 2
        // Predicated region
        $region45: #{tpu_custom_call.1} parent=43 // pred_check
          %p377 = pneg %p136
        $region46: #{tpu_custom_call.1} parent=43 // pred_check_branch
          %379 = sbr.rel (%p377) target = $region48
        $region47: #{tpu_custom_call.1} parent=43 // pred_region
          %s380 = sand.u32 %s121, 1
          %s381 = scalar_lea.sflag [#allocation3], %s380
          %s382 = sand.u32 %s121, 1
          %s383 = smul.addr %s382, 8
          %s384 = scalar_lea.vmem [#allocation2], %s383
          %386 = dma.done %s381, 128
        $region48: #{tpu_custom_call.1} parent=43 // pred_fallthru
          _
      $region44: #{tpu_custom_call.1} parent=5 // pred_fallthru
        _
    $region6: #{tpu_custom_call.1} parent=1 // loop_footer
      %s17 = sadd.s32 1, %s13
    $region7: #{tpu_custom_call.1} parent=1 // loop_footer_branch
      %12 = sbr.rel target = $region3
    $region8: #{tpu_custom_call.1} parent=1 // loop_exit
      _
    %387 = vsyncpa [#allocation3], 1
    %s388 = scalar_lea.sflag [#allocation3], 1
    %389 = vsyncpa %s388, 1

</llo_original>
